<compile_context>
chip_gen: v6e
topology: v6e:2x2x1
jax: 0.10.0
libtpu: 0.0.40
codegen_flags: <defaults>
</compile_context>

<pallas_src>
import jax
import jax.numpy as jnp
from jax.experimental import pallas as pl
from jax.experimental.pallas import tpu as pltpu
import numpy as np

EPS = 1e-5
LANE = 128


def actor_kernel(x_ref, w1_ref, b1_ref, w2_ref, b2_ref, w3_ref, b3_ref, out_ref):
    inv_b = 1.0 / x_ref.shape[0]  # static batch size -> compile-time constant

    # ---- fc1 (bf16 MXU inputs, f32 accumulate) + bias + ReLU ----------------
    h1 = jnp.dot(x_ref[...], w1_ref[...], preferred_element_type=jnp.float32)
    h1 = jnp.maximum(h1 + b1_ref[...], 0.0)

    # ---- BatchNorm1d(fc1_units): one-pass batch stats, gamma=1, beta=0 ------
    mu1 = jnp.sum(h1, axis=0, keepdims=True) * inv_b
    msq1 = jnp.sum(h1 * h1, axis=0, keepdims=True) * inv_b
    var1 = jnp.maximum(msq1 - mu1 * mu1, 0.0)  # clamp cancellation negatives
    s1 = jax.lax.rsqrt(var1 + EPS)
    h1n = (h1 * s1 - mu1 * s1).astype(jnp.bfloat16)

    # ---- fc2 + bias + ReLU --------------------------------------------------
    h2 = jnp.dot(h1n, w2_ref[...], preferred_element_type=jnp.float32)
    h2 = jnp.maximum(h2 + b2_ref[...], 0.0)

    # ---- BatchNorm1d(fc2_units) ---------------------------------------------
    mu2 = jnp.sum(h2, axis=0, keepdims=True) * inv_b
    msq2 = jnp.sum(h2 * h2, axis=0, keepdims=True) * inv_b
    var2 = jnp.maximum(msq2 - mu2 * mu2, 0.0)
    s2 = jax.lax.rsqrt(var2 + EPS)
    h2n = (h2 * s2 - mu2 * s2).astype(jnp.bfloat16)

    # ---- fc3 (lane-dense padded output) + tanh ------------------------------
    out = jnp.dot(h2n, w3_ref[...], preferred_element_type=jnp.float32) + b3_ref[...]
    out_ref[...] = jnp.tanh(out)


def actor_forward(x, params):
    """x: [B, state_size] float32.  params: dict of float32 weights/biases."""
    w1, b1, w2, b2, w3, b3 = (params["w1"], params["b1"], params["w2"],
                              params["b2"], params["w3"], params["b3"])
    B = x.shape[0]
    action_size = w3.shape[1]

    # Pad fc3 output columns to a multiple of 128 lanes -> unmasked stores.
    out_pad = ((action_size + LANE - 1) // LANE) * LANE
    pad = out_pad - action_size
    w3p = jnp.pad(w3, ((0, 0), (0, pad)))
    b3p = jnp.pad(b3, ((0, 0), (0, pad)))

    # bf16 inputs for the MXU (biases stay f32, added to f32 accumulators).
    x_bf = x.astype(jnp.bfloat16)
    w1_bf = w1.astype(jnp.bfloat16)
    w2_bf = w2.astype(jnp.bfloat16)
    w3_bf = w3p.astype(jnp.bfloat16)

    full = lambda shape: pl.BlockSpec(shape, lambda: tuple(0 for _ in shape))

    out = pl.pallas_call(
        actor_kernel,
        out_shape=jax.ShapeDtypeStruct((B, out_pad), jnp.float32),
        grid_spec=pltpu.PrefetchScalarGridSpec(
            num_scalar_prefetch=0,
            grid=(),  # whole problem fits one VMEM block at these sizes
            in_specs=[
                full(x_bf.shape),
                full(w1_bf.shape), full(b1.shape),
                full(w2_bf.shape), full(b2.shape),
                full(w3_bf.shape), full(b3p.shape),
            ],
            out_specs=full((B, out_pad)),
        ),
    )(x_bf, w1_bf, b1, w2_bf, b2, w3_bf, b3p)

    return out[:, :action_size]


def init_params(key, state_size, action_size, fc1_units=128, fc2_units=64):
    """Deterministic synthetic init mirroring the PyTorch bounds.

    PyTorch `weights_init` uses 1/sqrt(weight.size(0)) = 1/sqrt(out_features)
    as the uniform bound for fc1/fc2 weights; fc3 uses +/-0.003.  Biases use
    the nn.Linear default +/-1/sqrt(in_features).
    Weights stored [in, out] (transposed vs PyTorch [out, in]).
    """
    ks = jax.random.split(key, 6)

    def u(k, shape, bound):
        return jax.random.uniform(k, shape, jnp.float32, minval=-bound, maxval=bound)

    w1 = u(ks[0], (state_size, fc1_units), 1.0 / np.sqrt(fc1_units))
    b1 = u(ks[1], (1, fc1_units), 1.0 / np.sqrt(state_size))
    w2 = u(ks[2], (fc1_units, fc2_units), 1.0 / np.sqrt(fc2_units))
    b2 = u(ks[3], (1, fc2_units), 1.0 / np.sqrt(fc1_units))
    w3 = u(ks[4], (fc2_units, action_size), 0.003)
    b3 = u(ks[5], (1, action_size), 1.0 / np.sqrt(fc2_units))
    return {"w1": w1, "b1": b1, "w2": w2, "b2": b2, "w3": w3, "b3": b3}


def actor_reference(x, p):
    """Pure-JAX f32 reference of the same forward pass (training-mode BN)."""
    h1 = jnp.maximum(x @ p["w1"] + p["b1"], 0.0)
    h1 = (h1 - h1.mean(0, keepdims=True)) / jnp.sqrt(h1.var(0, keepdims=True) + EPS)
    h2 = jnp.maximum(h1 @ p["w2"] + p["b2"], 0.0)
    h2 = (h2 - h2.mean(0, keepdims=True)) / jnp.sqrt(h2.var(0, keepdims=True) + EPS)
    return jnp.tanh(h2 @ p["w3"] + p["b3"])


if __name__ == "__main__":
    key = jax.random.PRNGKey(0)
    k_x, k_p = jax.random.split(key)

    B, state_size, action_size = 8, 32, 4
    x = jax.random.normal(k_x, (B, state_size), jnp.float32)
    params = init_params(k_p, state_size, action_size)

    out = actor_forward(x, params)
    out = jax.block_until_ready(out)

    ref = actor_reference(x, params)
    # bf16 MXU inputs -> relaxed tolerance vs the f32 reference.
    np.testing.assert_allclose(np.asarray(out), np.asarray(ref), rtol=2e-2, atol=5e-3)

    assert out.shape == (B, action_size)
    print("KERNEL_OK")
</pallas_src>

<mosaic_0001>
module attributes {stable_mosaic.version = 11 : i64} {
  func.func @actor_kernel(%arg0: memref<8x32xbf16, #tpu.memory_space<vmem>>, %arg1: memref<32x128xbf16, #tpu.memory_space<vmem>>, %arg2: memref<1x128xf32, #tpu.memory_space<vmem>>, %arg3: memref<128x64xbf16, #tpu.memory_space<vmem>>, %arg4: memref<1x64xf32, #tpu.memory_space<vmem>>, %arg5: memref<64x128xbf16, #tpu.memory_space<vmem>>, %arg6: memref<1x128xf32, #tpu.memory_space<vmem>>, %arg7: memref<8x128xf32, #tpu.memory_space<vmem>>) attributes {dimension_semantics = [], scalar_prefetch = 0 : i64, scratch_operands = 0 : i64, tpu.core_type = #tpu.core_type<tc>} {
    %c0 = arith.constant 0 : index
    %c0_0 = arith.constant 0 : index
    %0 = vector.load %arg0[%c0, %c0_0] : memref<8x32xbf16, #tpu.memory_space<vmem>>, vector<8x32xbf16>
    %c0_1 = arith.constant 0 : index
    %c0_2 = arith.constant 0 : index
    %1 = vector.load %arg1[%c0_1, %c0_2] : memref<32x128xbf16, #tpu.memory_space<vmem>>, vector<32x128xbf16>
    %cst = arith.constant dense<0.000000e+00> : vector<8x128xf32>
    %2 = tpu.matmul %0, %1, %cst {dimension_numbers = #tpu.dot_dimension_numbers<[1], [0], [0], [1], [0, 0, 1, 1], [], []>} : vector<8x32xbf16>, vector<32x128xbf16>, vector<8x128xf32> -> vector<8x128xf32>
    %c0_3 = arith.constant 0 : index
    %c0_4 = arith.constant 0 : index
    %3 = vector.load %arg2[%c0_3, %c0_4] : memref<1x128xf32, #tpu.memory_space<vmem>>, vector<1x128xf32>
    %4 = vector.broadcast %3 : vector<1x128xf32> to vector<8x128xf32>
    %5 = arith.addf %2, %4 : vector<8x128xf32>
    %cst_5 = arith.constant 0.000000e+00 : f32
    %6 = vector.broadcast %cst_5 : f32 to vector<8x128xf32>
    %7 = arith.maximumf %5, %6 : vector<8x128xf32>
    %cst_6 = arith.constant dense<0.000000e+00> : vector<128xf32>
    %8 = vector.multi_reduction <add>, %7, %cst_6 [0] : vector<8x128xf32> to vector<128xf32>
    %9 = vector.shape_cast %8 : vector<128xf32> to vector<1x128xf32>
    %cst_7 = arith.constant 1.250000e-01 : f32
    %10 = vector.broadcast %cst_7 : f32 to vector<1x128xf32>
    %11 = arith.mulf %9, %10 : vector<1x128xf32>
    %12 = arith.mulf %7, %7 : vector<8x128xf32>
    %cst_8 = arith.constant dense<0.000000e+00> : vector<128xf32>
    %13 = vector.multi_reduction <add>, %12, %cst_8 [0] : vector<8x128xf32> to vector<128xf32>
    %14 = vector.shape_cast %13 : vector<128xf32> to vector<1x128xf32>
    %cst_9 = arith.constant 1.250000e-01 : f32
    %15 = vector.broadcast %cst_9 : f32 to vector<1x128xf32>
    %16 = arith.mulf %14, %15 : vector<1x128xf32>
    %17 = arith.mulf %11, %11 : vector<1x128xf32>
    %18 = arith.subf %16, %17 : vector<1x128xf32>
    %cst_10 = arith.constant 0.000000e+00 : f32
    %19 = vector.broadcast %cst_10 : f32 to vector<1x128xf32>
    %20 = arith.maximumf %18, %19 : vector<1x128xf32>
    %cst_11 = arith.constant 9.99999974E-6 : f32
    %21 = vector.broadcast %cst_11 : f32 to vector<1x128xf32>
    %22 = arith.addf %20, %21 : vector<1x128xf32>
    %23 = math.rsqrt %22 : vector<1x128xf32>
    %24 = vector.broadcast %23 : vector<1x128xf32> to vector<8x128xf32>
    %25 = arith.mulf %7, %24 : vector<8x128xf32>
    %26 = arith.mulf %11, %23 : vector<1x128xf32>
    %27 = vector.broadcast %26 : vector<1x128xf32> to vector<8x128xf32>
    %28 = arith.subf %25, %27 : vector<8x128xf32>
    %29 = arith.truncf %28 : vector<8x128xf32> to vector<8x128xbf16>
    %c0_12 = arith.constant 0 : index
    %c0_13 = arith.constant 0 : index
    %30 = vector.load %arg3[%c0_12, %c0_13] : memref<128x64xbf16, #tpu.memory_space<vmem>>, vector<128x64xbf16>
    %cst_14 = arith.constant dense<0.000000e+00> : vector<8x64xf32>
    %31 = tpu.matmul %29, %30, %cst_14 {dimension_numbers = #tpu.dot_dimension_numbers<[1], [0], [0], [1], [0, 0, 1, 1], [], []>} : vector<8x128xbf16>, vector<128x64xbf16>, vector<8x64xf32> -> vector<8x64xf32>
    %c0_15 = arith.constant 0 : index
    %c0_16 = arith.constant 0 : index
    %32 = vector.load %arg4[%c0_15, %c0_16] : memref<1x64xf32, #tpu.memory_space<vmem>>, vector<1x64xf32>
    %33 = vector.broadcast %32 : vector<1x64xf32> to vector<8x64xf32>
    %34 = arith.addf %31, %33 : vector<8x64xf32>
    %cst_17 = arith.constant 0.000000e+00 : f32
    %35 = vector.broadcast %cst_17 : f32 to vector<8x64xf32>
    %36 = arith.maximumf %34, %35 : vector<8x64xf32>
    %cst_18 = arith.constant dense<0.000000e+00> : vector<64xf32>
    %37 = vector.multi_reduction <add>, %36, %cst_18 [0] : vector<8x64xf32> to vector<64xf32>
    %38 = vector.shape_cast %37 : vector<64xf32> to vector<1x64xf32>
    %cst_19 = arith.constant 1.250000e-01 : f32
    %39 = vector.broadcast %cst_19 : f32 to vector<1x64xf32>
    %40 = arith.mulf %38, %39 : vector<1x64xf32>
    %41 = arith.mulf %36, %36 : vector<8x64xf32>
    %cst_20 = arith.constant dense<0.000000e+00> : vector<64xf32>
    %42 = vector.multi_reduction <add>, %41, %cst_20 [0] : vector<8x64xf32> to vector<64xf32>
    %43 = vector.shape_cast %42 : vector<64xf32> to vector<1x64xf32>
    %cst_21 = arith.constant 1.250000e-01 : f32
    %44 = vector.broadcast %cst_21 : f32 to vector<1x64xf32>
    %45 = arith.mulf %43, %44 : vector<1x64xf32>
    %46 = arith.mulf %40, %40 : vector<1x64xf32>
    %47 = arith.subf %45, %46 : vector<1x64xf32>
    %cst_22 = arith.constant 0.000000e+00 : f32
    %48 = vector.broadcast %cst_22 : f32 to vector<1x64xf32>
    %49 = arith.maximumf %47, %48 : vector<1x64xf32>
    %cst_23 = arith.constant 9.99999974E-6 : f32
    %50 = vector.broadcast %cst_23 : f32 to vector<1x64xf32>
    %51 = arith.addf %49, %50 : vector<1x64xf32>
    %52 = math.rsqrt %51 : vector<1x64xf32>
    %53 = vector.broadcast %52 : vector<1x64xf32> to vector<8x64xf32>
    %54 = arith.mulf %36, %53 : vector<8x64xf32>
    %55 = arith.mulf %40, %52 : vector<1x64xf32>
    %56 = vector.broadcast %55 : vector<1x64xf32> to vector<8x64xf32>
    %57 = arith.subf %54, %56 : vector<8x64xf32>
    %58 = arith.truncf %57 : vector<8x64xf32> to vector<8x64xbf16>
    %c0_24 = arith.constant 0 : index
    %c0_25 = arith.constant 0 : index
    %59 = vector.load %arg5[%c0_24, %c0_25] : memref<64x128xbf16, #tpu.memory_space<vmem>>, vector<64x128xbf16>
    %cst_26 = arith.constant dense<0.000000e+00> : vector<8x128xf32>
    %60 = tpu.matmul %58, %59, %cst_26 {dimension_numbers = #tpu.dot_dimension_numbers<[1], [0], [0], [1], [0, 0, 1, 1], [], []>} : vector<8x64xbf16>, vector<64x128xbf16>, vector<8x128xf32> -> vector<8x128xf32>
    %c0_27 = arith.constant 0 : index
    %c0_28 = arith.constant 0 : index
    %61 = vector.load %arg6[%c0_27, %c0_28] : memref<1x128xf32, #tpu.memory_space<vmem>>, vector<1x128xf32>
    %62 = vector.broadcast %61 : vector<1x128xf32> to vector<8x128xf32>
    %63 = arith.addf %60, %62 : vector<8x128xf32>
    %64 = math.tanh %63 : vector<8x128xf32>
    %c0_29 = arith.constant 0 : index
    %c0_30 = arith.constant 0 : index
    %65 = vector.load %arg7[%c0_29, %c0_30] : memref<8x128xf32, #tpu.memory_space<vmem>>, vector<8x128xf32>
    tpu.vector_store %arg7[%c0_29, %c0_30], %64 {strides = array<i32>} : memref<8x128xf32, #tpu.memory_space<vmem>>, vector<8x128xf32>,
    return
  }
}

</mosaic_0001>

<llo_original>
// kernel: tpu_custom_call.1
$region0: #{tpu_custom_call.1}
  #allocation0 [shape = 'u32[]', space=smem, size = 0x4, offset = 0x4, fixed_abs, tag = 'smem constant byte address 0x4 - core index']
  #allocation1 [shape = 'u32[144,128]{1,0:T(1,128)}', space=vmem, size = 0x12000, scoped, tag = 'internal scratch']
  %s0 = inlined_call_operand.vmem [shape: bf16[8,32], index: 0, kind: input, shape index: {}]
  %s1 = inlined_call_operand.vmem [shape: bf16[32,128], index: 1, kind: input, shape index: {}]
  %s2 = inlined_call_operand.vmem [shape: f32[1,128], index: 2, kind: input, shape index: {}]
  %s3 = inlined_call_operand.vmem [shape: bf16[128,64], index: 3, kind: input, shape index: {}]
  %s4 = inlined_call_operand.vmem [shape: f32[1,64], index: 4, kind: input, shape index: {}]
  %s5 = inlined_call_operand.vmem [shape: bf16[64,128], index: 5, kind: input, shape index: {}]
  %s6 = inlined_call_operand.vmem [shape: f32[1,128], index: 6, kind: input, shape index: {}]
  %s7 = inlined_call_operand.hbm [shape: f32[8,128], index: 7, kind: output, shape index: {}]
  %s8 = sld [smem:[#allocation0]]
  $region38: #{tpu_custom_call.1} parent=0
    _
  %s10 = ssub.s32 1, %s8
  %s11 = scalar_select 0, %s10, %s8
  $region1: #{tpu_custom_call.1} parent=0
    #allocation2 [shape = 'u8[4096]{0}', space=vmem, size = 0x1000, scoped, tag = 'output window, operand 0, single buffered']
    #allocation3 [shape = 's32[1]{0}', space=sflag, size = 0x4, scoped, tag = 'scoped memory for tpu_custom_call.1']
    %12 = vsyncpa [#allocation3], 0
    // Predicated region
    $region2: #{tpu_custom_call.1} parent=1 // pred_check
      _
    $region3: #{tpu_custom_call.1} parent=1 // pred_check_branch
      %14 = sbr.rel (0) target = $region5
    $region4: #{tpu_custom_call.1} parent=1 // pred_region
      _
    $region5: #{tpu_custom_call.1} parent=1 // pred_fallthru
      _
    // Predicated region
    $region6: #{tpu_custom_call.1} parent=1 // pred_check
      _
    $region7: #{tpu_custom_call.1} parent=1 // pred_check_branch
      %16 = sbr.rel (0) target = $region9
    $region8: #{tpu_custom_call.1} parent=1 // pred_region
      _
    $region9: #{tpu_custom_call.1} parent=1 // pred_fallthru
      _
    // Predicated region
    $region10: #{tpu_custom_call.1} parent=1 // pred_check
      _
    $region11: #{tpu_custom_call.1} parent=1 // pred_check_branch
      %18 = sbr.rel (0) target = $region13
    $region12: #{tpu_custom_call.1} parent=1 // pred_region
      _
    $region13: #{tpu_custom_call.1} parent=1 // pred_fallthru
      _
    // Predicated region
    $region14: #{tpu_custom_call.1} parent=1 // pred_check
      _
    $region15: #{tpu_custom_call.1} parent=1 // pred_check_branch
      %20 = sbr.rel (0) target = $region17
    $region16: #{tpu_custom_call.1} parent=1 // pred_region
      _
    $region17: #{tpu_custom_call.1} parent=1 // pred_fallthru
      _
    // Predicated region
    $region18: #{tpu_custom_call.1} parent=1 // pred_check
      _
    $region19: #{tpu_custom_call.1} parent=1 // pred_check_branch
      %22 = sbr.rel (0) target = $region21
    $region20: #{tpu_custom_call.1} parent=1 // pred_region
      _
    $region21: #{tpu_custom_call.1} parent=1 // pred_fallthru
      _
    // Predicated region
    $region22: #{tpu_custom_call.1} parent=1 // pred_check
      _
    $region23: #{tpu_custom_call.1} parent=1 // pred_check_branch
      %24 = sbr.rel (0) target = $region25
    $region24: #{tpu_custom_call.1} parent=1 // pred_region
      _
    $region25: #{tpu_custom_call.1} parent=1 // pred_fallthru
      _
    // Predicated region
    $region26: #{tpu_custom_call.1} parent=1 // pred_check
      _
    $region27: #{tpu_custom_call.1} parent=1 // pred_check_branch
      %26 = sbr.rel (0) target = $region29
    $region28: #{tpu_custom_call.1} parent=1 // pred_region
      _
    $region29: #{tpu_custom_call.1} parent=1 // pred_fallthru
      _
    %v28 = vld [vmem:[%s0] sm:$0xf]
    %v29 = vld [vmem:[%s1] sm:$0xf]
    %v30 = vld [vmem:[%s1 + $0x4] sm:$0xf]
    %v31 = vld [vmem:[%s1 + $0x8] sm:$0xf]
    %v32 = vld [vmem:[%s1 + $0xc] sm:$0xf]
    %v33 = vld [vmem:[%s2] sm:$0x1]
    %v35 = vlaneseq
    %v36 = vshrl.u32 %v35, 7
    %v37 = vsub.s32 0, %v36
    %v38 = vrot.slane %v33, %v37
    %v44 = vunpack.c.l.b16 %v29
    %v45 = vunpack.c.l.b16 %v30
    %v46 = vunpack.c.l.b16 %v31
    %v47 = vunpack.c.l.b16 %v32
    %v48 = vpack.c.b16 %v45, %v44
    %v49 = vpack.c.b16 %v47, %v46
    %vm52 = vcmask 261120
    %v54 = vsel %vm52, %v28, 0
    %56 = vmatprep.subr.bf16.mxu0 0
    %57 = vmatpush1.bf16.msra.mxu0 0
    %58 = vmatprep.subr.bf16.mxu0 0
    %59 = vmatpush1.bf16.msra.mxu0 0
    %60 = vmatprep.subr.bf16.mxu0 0
    %61 = vmatpush1.bf16.msra.mxu0 0
    %62 = vmatprep.subr.bf16.mxu0 0
    %63 = vmatpush1.bf16.msra.mxu0 0
    %64 = vmatprep.subr.bf16.mxu0 0
    %65 = vmatpush1.bf16.msra.mxu0 0
    %66 = vmatprep.subr.bf16.mxu0 0
    %67 = vmatpush1.bf16.msra.mxu0 0
    %68 = vmatprep.subr.bf16.mxu0 0
    %69 = vmatpush1.bf16.msra.mxu0 %v49
    %70 = vmatprep.subr.bf16.mxu0 0
    %71 = vmatpush1.bf16.msra.mxu0 %v48
    %72 = vmatprep.subr.bf16.mxu0 0
    %73 = vmatpush2.bf16.msra.mxu0 0
    %74 = vmatprep.subr.bf16.mxu0 0
    %75 = vmatpush2.bf16.msra.mxu0 0
    %76 = vmatprep.subr.bf16.mxu0 0
    %77 = vmatpush2.bf16.msra.mxu0 0
    %78 = vmatprep.subr.bf16.mxu0 0
    %79 = vmatpush2.bf16.msra.mxu0 0
    %80 = vmatprep.subr.bf16.mxu0 0
    %81 = vmatpush2.bf16.msra.mxu0 0
    %82 = vmatprep.subr.bf16.mxu0 0
    %83 = vmatpush2.bf16.msra.mxu0 0
    %84 = vmatprep.subr.bf16.mxu0 0
    %85 = vmatpush2.bf16.msra.mxu0 0
    %86 = vmatprep.subr.bf16.mxu0 0
    %87 = vmatpush2.bf16.msra.mxu0 0
    %88 = vmatprep.mubr.bf16.mxu0 0
    %89 = vmatmul.mubr.bf16.gmra.mxu0 %v54
    %v90 = vpop.f32.mrf.mxu0
    %v91 = vadd.f32 %v38, %v90
    %v92 = vpop.f32.mrf.mxu0
    %v93 = vpop.f32.mrf.mxu0
    %v94 = vpop.f32.mrf.mxu0
    %95 = vdwg.mxu0
    %v96 = vmax.f32 %v91, 0.0
    %v97 = vrot.slane %v96, 4
    %v98 = vadd.f32 %v96, %v97
    %v99 = vrot.slane %v98, 2
    %v100 = vadd.f32 %v98, %v99
    %v101 = vrot.slane %v100, 1
    %v102 = vadd.f32 %v100, %v101
    %v103 = vmul.f32 %v102, 0.125
    %v104 = vmul.f32 %v96, %v96
    %v105 = vrot.slane %v104, 4
    %v106 = vadd.f32 %v104, %v105
    %v107 = vrot.slane %v106, 2
    %v108 = vadd.f32 %v106, %v107
    %v109 = vrot.slane %v108, 1
    %v110 = vadd.f32 %v108, %v109
    %v111 = vmul.f32 %v110, 0.125
    %v112 = vmul.f32 %v103, %v103
    %v113 = vsub.f32 %v111, %v112
    %v114 = vmax.f32 %v113, 0.0
    %v115 = vadd.f32 %v114, 1e-05
    %v116 = vrsqrt.pop %v115
    %v117 = vmul.f32 %v96, %v116
    %v118 = vmul.f32 %v103, %v116
    %v119 = vsub.f32 %v117, %v118
    %v120 = vpack.c.bf16 %v119, %v119
    %v121 = vld [vmem:[%s3] sm:$0xf]
    %v122 = vld [vmem:[%s3 + $0x4] sm:$0xf]
    %v123 = vld [vmem:[%s3 + $0x8] sm:$0xf]
    %v124 = vld [vmem:[%s3 + $0xc] sm:$0xf]
    %v125 = vld [vmem:[%s3 + $0x10] sm:$0xf]
    %v126 = vld [vmem:[%s3 + $0x14] sm:$0xf]
    %v127 = vld [vmem:[%s3 + $0x18] sm:$0xf]
    %v128 = vld [vmem:[%s3 + $0x1c] sm:$0xf]
    %v129 = vld [vmem:[%s3 + $0x20] sm:$0xf]
    %v130 = vld [vmem:[%s3 + $0x24] sm:$0xf]
    %v131 = vld [vmem:[%s3 + $0x28] sm:$0xf]
    %v132 = vld [vmem:[%s3 + $0x2c] sm:$0xf]
    %v133 = vld [vmem:[%s3 + $0x30] sm:$0xf]
    %v134 = vld [vmem:[%s3 + $0x34] sm:$0xf]
    %v135 = vld [vmem:[%s3 + $0x38] sm:$0xf]
    %v136 = vld [vmem:[%s3 + $0x3c] sm:$0xf]
    %v137 = vld [vmem:[%s4] sm:$0x1]
    %v139 = vlaneseq
    %v140 = vshrl.u32 %v139, 7
    %v141 = vsub.s32 0, %v140
    %v142 = vrot.slane %v137, %v141
    %v160 = vunpack.c.l.b16 %v121
    %v161 = vunpack.c.l.b16 %v122
    %v162 = vunpack.c.l.b16 %v123
    %v163 = vunpack.c.l.b16 %v124
    %v164 = vunpack.c.l.b16 %v125
    %v165 = vunpack.c.l.b16 %v126
    %v166 = vunpack.c.l.b16 %v127
    %v167 = vunpack.c.l.b16 %v128
    %v168 = vunpack.c.l.b16 %v129
    %v169 = vunpack.c.l.b16 %v130
    %v170 = vunpack.c.l.b16 %v131
    %v171 = vunpack.c.l.b16 %v132
    %v172 = vunpack.c.l.b16 %v133
    %v173 = vunpack.c.l.b16 %v134
    %v174 = vunpack.c.l.b16 %v135
    %v175 = vunpack.c.l.b16 %v136
    %v176 = vpack.c.b16 %v161, %v160
    %v177 = vpack.c.b16 %v163, %v162
    %v178 = vpack.c.b16 %v165, %v164
    %v179 = vpack.c.b16 %v167, %v166
    %v180 = vpack.c.b16 %v169, %v168
    %v181 = vpack.c.b16 %v171, %v170
    %v182 = vpack.c.b16 %v173, %v172
    %v183 = vpack.c.b16 %v175, %v174
    %192 = vmatprep.subr.bf16.mxu0 0
    %193 = vmatpush1.bf16.msra.mxu0 %v183
    %194 = vmatprep.subr.bf16.mxu0 0
    %195 = vmatpush1.bf16.msra.mxu0 %v182
    %196 = vmatprep.subr.bf16.mxu0 0
    %197 = vmatpush1.bf16.msra.mxu0 %v181
    %198 = vmatprep.subr.bf16.mxu0 0
    %199 = vmatpush1.bf16.msra.mxu0 %v180
    %200 = vmatprep.subr.bf16.mxu0 0
    %201 = vmatpush1.bf16.msra.mxu0 %v179
    %202 = vmatprep.subr.bf16.mxu0 0
    %203 = vmatpush1.bf16.msra.mxu0 %v178
    %204 = vmatprep.subr.bf16.mxu0 0
    %205 = vmatpush1.bf16.msra.mxu0 %v177
    %206 = vmatprep.subr.bf16.mxu0 0
    %207 = vmatpush1.bf16.msra.mxu0 %v176
    %208 = vmatprep.subr.bf16.mxu0 0
    %209 = vmatpush2.bf16.msra.mxu0 0
    %210 = vmatprep.subr.bf16.mxu0 0
    %211 = vmatpush2.bf16.msra.mxu0 0
    %212 = vmatprep.subr.bf16.mxu0 0
    %213 = vmatpush2.bf16.msra.mxu0 0
    %214 = vmatprep.subr.bf16.mxu0 0
    %215 = vmatpush2.bf16.msra.mxu0 0
    %216 = vmatprep.subr.bf16.mxu0 0
    %217 = vmatpush2.bf16.msra.mxu0 0
    %218 = vmatprep.subr.bf16.mxu0 0
    %219 = vmatpush2.bf16.msra.mxu0 0
    %220 = vmatprep.subr.bf16.mxu0 0
    %221 = vmatpush2.bf16.msra.mxu0 0
    %222 = vmatprep.subr.bf16.mxu0 0
    %223 = vmatpush2.bf16.msra.mxu0 0
    %224 = vmatprep.mubr.bf16.mxu0 0
    %225 = vmatmul.mubr.bf16.gmra.mxu0 %v120
    %v226 = vpop.f32.mrf.mxu0
    %v227 = vadd.f32 %v142, %v226
    %v228 = vpop.f32.mrf.mxu0
    %v229 = vpop.f32.mrf.mxu0
    %v230 = vpop.f32.mrf.mxu0
    %231 = vdwg.mxu0
    %v232 = vmax.f32 %v227, 0.0
    %vm233 = vcmask 523264
    %v234 = vsel %vm233, %v232, 0.0
    %v235 = vrot.slane %v234, 4
    %v236 = vadd.f32 %v234, %v235
    %v237 = vrot.slane %v236, 2
    %v238 = vadd.f32 %v236, %v237
    %v239 = vrot.slane %v238, 1
    %v240 = vadd.f32 %v238, %v239
    %v241 = vmul.f32 %v240, 0.125
    %v242 = vmul.f32 %v232, %v232
    %v243 = vsel %vm233, %v242, 0.0
    %v244 = vrot.slane %v243, 4
    %v245 = vadd.f32 %v243, %v244
    %v246 = vrot.slane %v245, 2
    %v247 = vadd.f32 %v245, %v246
    %v248 = vrot.slane %v247, 1
    %v249 = vadd.f32 %v247, %v248
    %v250 = vmul.f32 %v249, 0.125
    %v251 = vmul.f32 %v241, %v241
    %v252 = vsub.f32 %v250, %v251
    %v253 = vmax.f32 %v252, 0.0
    %v254 = vadd.f32 %v253, 1e-05
    %v255 = vrsqrt.pop %v254
    %v256 = vmul.f32 %v232, %v255
    %v257 = vmul.f32 %v241, %v255
    %v258 = vsub.f32 %v256, %v257
    %v259 = vpack.c.bf16 %v258, %v258
    %v260 = vld [vmem:[%s5] sm:$0xf]
    %v261 = vld [vmem:[%s5 + $0x4] sm:$0xf]
    %v262 = vld [vmem:[%s5 + $0x8] sm:$0xf]
    %v263 = vld [vmem:[%s5 + $0xc] sm:$0xf]
    %v264 = vld [vmem:[%s5 + $0x10] sm:$0xf]
    %v265 = vld [vmem:[%s5 + $0x14] sm:$0xf]
    %v266 = vld [vmem:[%s5 + $0x18] sm:$0xf]
    %v267 = vld [vmem:[%s5 + $0x1c] sm:$0xf]
    %v268 = vld [vmem:[%s6] sm:$0x1]
    %v270 = vlaneseq
    %v271 = vshrl.u32 %v270, 7
    %v272 = vsub.s32 0, %v271
    %v273 = vrot.slane %v268, %v272
    %v283 = vunpack.c.l.b16 %v260
    %v284 = vunpack.c.l.b16 %v261
    %v285 = vunpack.c.l.b16 %v262
    %v286 = vunpack.c.l.b16 %v263
    %v287 = vunpack.c.l.b16 %v264
    %v288 = vunpack.c.l.b16 %v265
    %v289 = vunpack.c.l.b16 %v266
    %v290 = vunpack.c.l.b16 %v267
    %v291 = vpack.c.b16 %v284, %v283
    %v292 = vpack.c.b16 %v286, %v285
    %v293 = vpack.c.b16 %v288, %v287
    %v294 = vpack.c.b16 %v290, %v289
    %v300 = vsel %vm233, %v259, 0
    %302 = vmatprep.subr.bf16.mxu0 0
    %303 = vmatpush1.bf16.msra.mxu0 0
    %304 = vmatprep.subr.bf16.mxu0 0
    %305 = vmatpush1.bf16.msra.mxu0 0
    %306 = vmatprep.subr.bf16.mxu0 0
    %307 = vmatpush1.bf16.msra.mxu0 0
    %308 = vmatprep.subr.bf16.mxu0 0
    %309 = vmatpush1.bf16.msra.mxu0 0
    %310 = vmatprep.subr.bf16.mxu0 0
    %311 = vmatpush1.bf16.msra.mxu0 %v294
    %312 = vmatprep.subr.bf16.mxu0 0
    %313 = vmatpush1.bf16.msra.mxu0 %v293
    %314 = vmatprep.subr.bf16.mxu0 0
    %315 = vmatpush1.bf16.msra.mxu0 %v292
    %316 = vmatprep.subr.bf16.mxu0 0
    %317 = vmatpush1.bf16.msra.mxu0 %v291
    %318 = vmatprep.subr.bf16.mxu0 0
    %319 = vmatpush2.bf16.msra.mxu0 0
    %320 = vmatprep.subr.bf16.mxu0 0
    %321 = vmatpush2.bf16.msra.mxu0 0
    %322 = vmatprep.subr.bf16.mxu0 0
    %323 = vmatpush2.bf16.msra.mxu0 0
    %324 = vmatprep.subr.bf16.mxu0 0
    %325 = vmatpush2.bf16.msra.mxu0 0
    %326 = vmatprep.subr.bf16.mxu0 0
    %327 = vmatpush2.bf16.msra.mxu0 0
    %328 = vmatprep.subr.bf16.mxu0 0
    %329 = vmatpush2.bf16.msra.mxu0 0
    %330 = vmatprep.subr.bf16.mxu0 0
    %331 = vmatpush2.bf16.msra.mxu0 0
    %332 = vmatprep.subr.bf16.mxu0 0
    %333 = vmatpush2.bf16.msra.mxu0 0
    %334 = vmatprep.mubr.bf16.mxu0 0
    %335 = vmatmul.mubr.bf16.gmra.mxu0 %v300
    %v336 = vpop.f32.mrf.mxu0
    %v337 = vadd.f32 %v273, %v336
    %v338 = vpop.f32.mrf.mxu0
    %v339 = vpop.f32.mrf.mxu0
    %v340 = vpop.f32.mrf.mxu0
    %341 = vdwg.mxu0
    %v342 = vtanh.pop %v337
    %343 = vst [vmem:[#allocation2] sm:$0xff] %v342
    // Predicated region
    $region30: #{tpu_custom_call.1} parent=1 // pred_check
      _
    $region31: #{tpu_custom_call.1} parent=1 // pred_check_branch
      %345 = sbr.rel (0) target = $region33
    $region32: #{tpu_custom_call.1} parent=1 // pred_region
      %s347 = ssub.s32 128, 128
      %348 = vsyncadd [#allocation3], %s347
      %s350 = sshll.u32 [#allocation2], 4
      %s351 = int_to_ptr.vmem [resolvable:$true] %s350
      %353 = dma.vmem_to_hbm [thread:$0]  %s351, 128, %s7, [#allocation3]
    $region33: #{tpu_custom_call.1} parent=1 // pred_fallthru
      _
    // Predicated region
    $region34: #{tpu_custom_call.1} parent=1 // pred_check
      _
    $region35: #{tpu_custom_call.1} parent=1 // pred_check_branch
      %355 = sbr.rel (0) target = $region37
    $region36: #{tpu_custom_call.1} parent=1 // pred_region
      %356 = dma.done [#allocation3], 128
    $region37: #{tpu_custom_call.1} parent=1 // pred_fallthru
      _
    %357 = vsyncpa [#allocation3], 1

</llo_original>
